<compile_context>
chip_gen: v5e
topology: v5e:2x2
jax: 0.10.0
libtpu: 0.0.40
codegen_flags: <defaults>
</compile_context>

<pallas_src>
import jax
import jax.numpy as jnp
from jax import lax
from jax.experimental import pallas as pl
from jax.experimental.pallas import tpu as pltpu


# --------------------------------------------------------------------------
# VMEM budgeting helpers (generation aware)
# --------------------------------------------------------------------------

def _vmem_capacity_bytes():
    """Physical VMEM per TensorCore; safe fallback = 64 MiB (v7x, the smallest)."""
    try:
        info = pltpu.get_tpu_info()
        cap = getattr(info, "vmem_capacity_bytes", None)
        if cap:
            return int(cap)
    except Exception:
        pass
    return 64 * 1024 * 1024


def _clamp_vmem_limit(est_bytes, capacity):
    """Always return an explicit scoped-VMEM limit (v5e default is only 16 MiB),
    never exceeding ~85% of physical VMEM (64 MiB on v7x)."""
    floor = 16 * 1024 * 1024
    cap = int(capacity * 0.85)
    return int(min(max(int(est_bytes * 1.25), floor), cap))


def _pick_col_tile(n, c, c8, capacity):
    """Column tile for the K/V projection kernel."""
    budget = int(capacity * 0.5)
    for t in (2048, 1024, 512, 256, 128):
        if n % t == 0:
            est = (4 * c * t * 4                      # x block, double-buffered
                   + 4 * (c + c8) * t * 4             # kv out block + f32 temp
                   + (c + c8) * (c + 2) * 4)          # fused weights + bias
            if est <= budget:
                return t
    return n                                          # small / non-aligned N


def _pick_row_tile(n, c, c8, *, want_attn, attn_bytes, kv_bytes, capacity):
    """Largest 128-multiple query-row tile dividing N that fits the VMEM budget."""
    budget = int(capacity * 0.6)
    fixed = 2 * (c + c8) * n * kv_bytes + c8 * (c + 2) * 4   # kv resident + wq/bq
    candidates = [t for t in (1024, 512, 256, 128) if n % t == 0]
    for t in candidates:
        per_step = (4 * c * t * 4                            # x + out blocks (dbl-buf)
                    + (2 * t * n * attn_bytes if want_attn else 0)
                    + 6 * t * n * 4)                         # energy/exp/attn f32 temps
        if fixed + per_step <= budget:
            return t
    if candidates:
        return candidates[-1]
    # TODO(synk): non-128-aligned N falls back to one full-row tile (masked
    # stores + full (N,N) energy slab); pad N in the caller for such shapes.
    return n


# --------------------------------------------------------------------------
# Kernels
# --------------------------------------------------------------------------

def _make_kv_kernel(matmul_dtype):
    """Stage 1: fused value/key projection, kv = [Wv; Wk] @ x + [bv; bk]."""

    def kernel(x_ref, wkv_ref, bkv_ref, kv_ref):
        x = x_ref[0].astype(matmul_dtype)                       # (C, TN)
        kv = jnp.dot(wkv_ref[...].astype(matmul_dtype), x,
                     preferred_element_type=jnp.float32) + bkv_ref[...]
        kv_ref[0] = kv.astype(kv_ref.dtype)                     # (C+C8, TN)

    return kernel


def _make_attn_kernel(c, matmul_dtype, approx_recip, return_attention):
    """Stage 2: per-(batch, query-row-tile) attention + residual."""

    def kernel(x_ref, kv_ref, wq_ref, bq_ref, gamma_ref, *out_refs):
        out_ref = out_refs[0]

        x_tile = x_ref[0]                                       # (C, TQ) f32

        # Query projection: only the current row tile.          (C8, TQ)
        q = jnp.dot(wq_ref[...].astype(matmul_dtype),
                    x_tile.astype(matmul_dtype),
                    preferred_element_type=jnp.float32) + bq_ref[...]

        # Pre-computed fused value/key projection (resident per batch).
        kv = kv_ref[0]                                          # (C+C8, N) matmul_dtype
        v = kv[:c, :]                                           # (C,  N)
        k = kv[c:, :]                                           # (C8, N)

        # energy[t, m] = sum_c q[c, t] * k[c, m]   (== q^T k, no explicit .T)
        energy = lax.dot_general(
            q.astype(matmul_dtype), k,
            (((0,), (0,)), ((), ())),
            preferred_element_type=jnp.float32)                 # (TQ, N)

        # Numerically-stable softmax over the lane axis (full, exact N).
        m = jnp.max(energy, axis=-1, keepdims=True)
        e = jnp.exp(energy - m)
        denom = jnp.sum(e, axis=-1, keepdims=True)
        attn = e * pl.reciprocal(denom, approx=approx_recip)    # (TQ, N) f32

        # out[c, t] = sum_m v[c, m] * attn[t, m]   (== v attn^T)
        o = lax.dot_general(
            v, attn.astype(matmul_dtype),
            (((1,), (1,)), ((), ())),
            preferred_element_type=jnp.float32)                 # (C, TQ)

        gamma = gamma_ref[0]                                    # SMEM scalar
        out_ref[0] = (gamma * o + x_tile).astype(out_ref.dtype)
        if return_attention:
            out_refs[1][0] = attn.astype(out_refs[1].dtype)

    return kernel


# --------------------------------------------------------------------------
# Wrapper
# --------------------------------------------------------------------------

def self_attn_forward(x_nchw, params, *, return_attention=True, precise=False,
                      row_tile=None, attn_dtype=None):
    """x_nchw: (B, C, W, H) float32.

    Returns (out_nchw, attention) if return_attention else out_nchw.
    precise=True  -> f32 MXU operands + exact reciprocal (verification only).
    precise=False -> bf16 MXU operands (f32 accumulation) + approx reciprocal
                     + bf16-stored attention map (production path).
    """
    B, C, W, H = x_nchw.shape
    N = W * H
    C8 = C // 8

    matmul_dtype = jnp.float32 if precise else jnp.bfloat16
    if attn_dtype is None:
        attn_dtype = jnp.float32 if precise else jnp.bfloat16

    x_bcn = x_nchw.reshape(B, C, N)                      # free reshape (no transpose)

    # PyTorch conv weights (out, in, 1, 1) -> (out, in) matmul weights (C-first).
    wq = params["wq"].reshape(C8, C).astype(jnp.float32)
    wk = params["wk"].reshape(C8, C).astype(jnp.float32)
    wv = params["wv"].reshape(C, C).astype(jnp.float32)
    wkv = jnp.concatenate([wv, wk], axis=0)              # (C + C8, C), v first (aligned)
    bq = params["bq"].reshape(C8, 1).astype(jnp.float32)
    bkv = jnp.concatenate(
        [params["bv"].reshape(C), params["bk"].reshape(C8)]).reshape(C + C8, 1)
    bkv = bkv.astype(jnp.float32)
    gamma = params["gamma"].reshape(1,).astype(jnp.float32)

    capacity = _vmem_capacity_bytes()
    kv_bytes = jnp.dtype(matmul_dtype).itemsize

    # ---- Stage 1: fused K/V projection (hoisted out of the row-tile loop) ----
    tn = _pick_col_tile(N, C, C8, capacity)
    kv_est = (4 * C * tn * 4 + 4 * (C + C8) * tn * 4 + (C + C8) * (C + 2) * 4)
    kv = pl.pallas_call(
        _make_kv_kernel(matmul_dtype),
        out_shape=jax.ShapeDtypeStruct((B, C + C8, N), matmul_dtype),
        grid_spec=pltpu.PrefetchScalarGridSpec(
            num_scalar_prefetch=0,
            grid=(B, N // tn),
            in_specs=[pl.BlockSpec((1, C, tn), lambda b, n: (b, 0, n)),
                      pl.BlockSpec((C + C8, C), lambda b, n: (0, 0)),
                      pl.BlockSpec((C + C8, 1), lambda b, n: (0, 0))],
            out_specs=pl.BlockSpec((1, C + C8, tn), lambda b, n: (b, 0, n))),
        compiler_params=pltpu.CompilerParams(
            dimension_semantics=("parallel", "parallel"),
            vmem_limit_bytes=_clamp_vmem_limit(kv_est, capacity)),
    )(x_bcn, wkv, bkv)

    # ---- Stage 2: attention per (batch, query-row tile) ----
    attn_bytes = jnp.dtype(attn_dtype).itemsize if return_attention else 0
    tq = row_tile if row_tile is not None else _pick_row_tile(
        N, C, C8, want_attn=return_attention, attn_bytes=attn_bytes,
        kv_bytes=kv_bytes, capacity=capacity)
    assert N % tq == 0, "row tile must divide N exactly (no padded softmax keys)"
    nt = N // tq

    kernel = _make_attn_kernel(C, matmul_dtype,
                               approx_recip=not precise,
                               return_attention=return_attention)

    in_specs = [
        pl.BlockSpec((1, C, tq), lambda b, j: (b, 0, j)),          # x row tile
        pl.BlockSpec((1, C + C8, N), lambda b, j: (b, 0, 0)),      # kv resident / batch
        pl.BlockSpec((C8, C), lambda b, j: (0, 0)),                # wq
        pl.BlockSpec((C8, 1), lambda b, j: (0, 0)),                # bq
        pl.BlockSpec(memory_space=pltpu.MemorySpace.SMEM),         # gamma scalar
    ]
    out_spec_out = pl.BlockSpec((1, C, tq), lambda b, j: (b, 0, j))

    est = (2 * (C + C8) * N * kv_bytes                  # kv resident (dbl-buffered)
           + 4 * C * tq * 4                             # x + out blocks (dbl-buffered)
           + 2 * tq * N * attn_bytes                    # attn out block (dbl-buffered)
           + 6 * tq * N * 4                             # energy/exp/attn f32 temps
           + C8 * (C + 2) * 4                           # wq + bq
           + 2 * C * tq * 4)                            # q / operand-cast slack

    if return_attention:
        out_shape = (jax.ShapeDtypeStruct((B, C, N), jnp.float32),
                     jax.ShapeDtypeStruct((B, N, N), attn_dtype))
        out_specs = (out_spec_out,
                     pl.BlockSpec((1, tq, N), lambda b, j: (b, j, 0)))
    else:
        out_shape = jax.ShapeDtypeStruct((B, C, N), jnp.float32)
        out_specs = out_spec_out

    result = pl.pallas_call(
        kernel,
        out_shape=out_shape,
        grid_spec=pltpu.PrefetchScalarGridSpec(
            num_scalar_prefetch=0,
            grid=(B, nt),
            in_specs=in_specs,
            out_specs=out_specs),
        compiler_params=pltpu.CompilerParams(
            dimension_semantics=("parallel", "parallel"),
            vmem_limit_bytes=_clamp_vmem_limit(est, capacity)),
    )(x_bcn, kv, wq, bq, gamma)

    if return_attention:
        out_bcn, attn = result
        return out_bcn.reshape(B, C, W, H), attn
    return result.reshape(B, C, W, H)


def self_attn_reference(x_nchw, params):
    """Pure-JAX reference mirroring the PyTorch forward exactly."""
    B, C, W, H = x_nchw.shape
    N = W * H
    C8 = C // 8
    x_flat = x_nchw.reshape(B, C, N)                                 # (B, C, N)
    wq = params["wq"].reshape(C8, C)
    wk = params["wk"].reshape(C8, C)
    wv = params["wv"].reshape(C, C)
    proj_q = jnp.einsum("oc,bcn->bon", wq, x_flat) + params["bq"][None, :, None]
    proj_k = jnp.einsum("oc,bcn->bon", wk, x_flat) + params["bk"][None, :, None]
    proj_v = jnp.einsum("oc,bcn->bon", wv, x_flat) + params["bv"][None, :, None]
    energy = jnp.einsum("bcn,bcm->bnm", proj_q, proj_k)              # (B, N, N)
    attn = jax.nn.softmax(energy, axis=-1)
    out = jnp.einsum("bcm,bnm->bcn", proj_v, attn)                   # (B, C, N)
    out = out.reshape(B, C, W, H)
    return params["gamma"][0] * out + x_nchw, attn


if __name__ == "__main__":
    B, C, W, H = 2, 32, 16, 16     # in_dim=32 -> query/key channels = 4, N = 256
    C8 = C // 8

    key = jax.random.PRNGKey(0)
    ks = jax.random.split(key, 7)
    params = {
        "wq": 0.1 * jax.random.normal(ks[0], (C8, C), jnp.float32),
        "bq": 0.1 * jax.random.normal(ks[1], (C8,), jnp.float32),
        "wk": 0.1 * jax.random.normal(ks[2], (C8, C), jnp.float32),
        "bk": 0.1 * jax.random.normal(ks[3], (C8,), jnp.float32),
        "wv": 0.1 * jax.random.normal(ks[4], (C, C), jnp.float32),
        "bv": 0.1 * jax.random.normal(ks[5], (C,), jnp.float32),
        # PyTorch inits gamma to 0 (out == x); use a nonzero deterministic value
        # so the attention path is actually exercised.
        "gamma": jnp.array([0.5], jnp.float32),
    }
    x = jax.random.normal(ks[6], (B, C, W, H), jnp.float32)

    ref_out, ref_attn = self_attn_reference(x, params)

    # 1) Verification path (f32 MXU operands, exact reciprocal, f32 attn map)
    #    with forced row tiling (2 query tiles of 128 rows per batch element).
    out, attn = self_attn_forward(x, params, precise=True, row_tile=128)
    out = jax.block_until_ready(out)
    attn = jax.block_until_ready(attn)
    assert out.shape == (B, C, W, H)
    assert attn.shape == (B, W * H, W * H)
    assert jnp.allclose(out, ref_out, atol=1e-3, rtol=1e-3)
    assert jnp.allclose(attn, ref_attn, atol=1e-4, rtol=1e-3)

    # 2) Production path (bf16 MXU operands, approx reciprocal, bf16 attn map,
    #    auto row tile -> single 256-row tile here).
    fout, fattn = self_attn_forward(x, params, precise=False)
    fout = jax.block_until_ready(fout)
    fattn = jax.block_until_ready(fattn)
    assert fattn.dtype == jnp.bfloat16
    assert jnp.allclose(fout, ref_out, atol=3e-2, rtol=3e-2)
    assert jnp.allclose(fattn.astype(jnp.float32), ref_attn, atol=1e-2, rtol=5e-2)

    # 3) Attention-map-free entry point (skips the B*N*N HBM write entirely).
    out_only = self_attn_forward(x, params, precise=True, return_attention=False)
    out_only = jax.block_until_ready(out_only)
    assert jnp.allclose(out_only, ref_out, atol=1e-3, rtol=1e-3)

    print("KERNEL_OK")
</pallas_src>

<mosaic_0001>
module attributes {stable_mosaic.version = 11 : i64} {
  func.func @kernel(%arg0: i32, %arg1: i32, %arg2: memref<1x32x256xf32, #tpu.memory_space<vmem>>, %arg3: memref<36x32xf32, #tpu.memory_space<vmem>>, %arg4: memref<36x1xf32, #tpu.memory_space<vmem>>, %arg5: memref<1x36x256xf32, #tpu.memory_space<vmem>>) attributes {dimension_semantics = [#tpu.dimension_semantics<parallel>, #tpu.dimension_semantics<parallel>], iteration_bounds = array<i64: 2, 1>, scalar_prefetch = 0 : i64, scratch_operands = 0 : i64, tpu.core_type = #tpu.core_type<tc>, window_params = [{transform_indices = @transform_0, window_bounds = array<i64: 1, 32, 256>}, {pipeline_mode = #tpu.pipeline_mode<synchronous>, transform_indices = @transform_1, window_bounds = array<i64: 36, 32>}, {pipeline_mode = #tpu.pipeline_mode<synchronous>, transform_indices = @transform_2, window_bounds = array<i64: 36, 1>}, {transform_indices = @transform_3, window_bounds = array<i64: 1, 36, 256>}]} {
    %c0 = arith.constant 0 : index
    %c0_0 = arith.constant 0 : index
    %c0_1 = arith.constant 0 : index
    %0 = vector.load %arg2[%c0, %c0_0, %c0_1] : memref<1x32x256xf32, #tpu.memory_space<vmem>>, vector<1x32x256xf32>
    %1 = vector.shape_cast %0 : vector<1x32x256xf32> to vector<32x256xf32>
    %c0_2 = arith.constant 0 : index
    %c0_3 = arith.constant 0 : index
    %2 = vector.load %arg3[%c0_2, %c0_3] : memref<36x32xf32, #tpu.memory_space<vmem>>, vector<36x32xf32>
    %cst = arith.constant dense<0.000000e+00> : vector<36x256xf32>
    %3 = tpu.matmul %2, %1, %cst {dimension_numbers = #tpu.dot_dimension_numbers<[1], [0], [0], [1], [0, 0, 1, 1], [], []>} : vector<36x32xf32>, vector<32x256xf32>, vector<36x256xf32> -> vector<36x256xf32>
    %c0_4 = arith.constant 0 : index
    %c0_5 = arith.constant 0 : index
    %4 = vector.load %arg4[%c0_4, %c0_5] : memref<36x1xf32, #tpu.memory_space<vmem>>, vector<36x1xf32>
    %5 = vector.broadcast %4 : vector<36x1xf32> to vector<36x256xf32>
    %6 = arith.addf %3, %5 : vector<36x256xf32>
    %c0_6 = arith.constant 0 : index
    %c0_7 = arith.constant 0 : index
    %c0_8 = arith.constant 0 : index
    %7 = vector.load %arg5[%c0_6, %c0_7, %c0_8] : memref<1x36x256xf32, #tpu.memory_space<vmem>>, vector<1x36x256xf32>
    %8 = vector.shape_cast %7 : vector<1x36x256xf32> to vector<36x256xf32>
    %9 = vector.shape_cast %6 : vector<36x256xf32> to vector<1x36x256xf32>
    tpu.vector_store %arg5[%c0_6, %c0_7, %c0_8], %9 {strides = array<i32>} : memref<1x36x256xf32, #tpu.memory_space<vmem>>, vector<1x36x256xf32>,
    return
  }
  func.func @transform_0(%arg0: i32, %arg1: i32) -> (i32, i32, i32) {
    %c0_i32 = arith.constant 0 : i32
    %c0_i32_0 = arith.constant 0 : i32
    return %arg0, %c0_i32, %arg1 : i32, i32, i32
  }
  func.func @transform_1(%arg0: i32, %arg1: i32) -> (i32, i32) {
    %c0_i32 = arith.constant 0 : i32
    %c0_i32_0 = arith.constant 0 : i32
    %c0_i32_1 = arith.constant 0 : i32
    return %c0_i32, %c0_i32_0 : i32, i32
  }
  func.func @transform_2(%arg0: i32, %arg1: i32) -> (i32, i32) {
    %c0_i32 = arith.constant 0 : i32
    %c0_i32_0 = arith.constant 0 : i32
    %c0_i32_1 = arith.constant 0 : i32
    return %c0_i32, %c0_i32_0 : i32, i32
  }
  func.func @transform_3(%arg0: i32, %arg1: i32) -> (i32, i32, i32) {
    %c0_i32 = arith.constant 0 : i32
    %c0_i32_0 = arith.constant 0 : i32
    return %arg0, %c0_i32, %arg1 : i32, i32, i32
  }
}

</mosaic_0001>

<llo_original>
// kernel: tpu_custom_call.1
$region0: #{tpu_custom_call.1}
  #allocation0 [shape = 'u32[]', space=smem, size = 0x4, offset = 0x4, fixed_abs, tag = 'smem constant byte address 0x4 - core index']
  #allocation1 [shape = 'u32[72,128]{1,0:T(1,128)}', space=vmem, size = 0x9000, scoped, tag = 'internal scratch']
  %s0 = inlined_call_operand.hbm [shape: f32[2,32,256], index: 0, kind: input, shape index: {}]
  %s1 = inlined_call_operand.vmem [shape: f32[36,32], index: 1, kind: input, shape index: {}]
  %s2 = inlined_call_operand.vmem [shape: f32[36,1], index: 2, kind: input, shape index: {}]
  %s3 = inlined_call_operand.vmem [shape: f32[2,36,256], index: 3, kind: output, shape index: {}]
  %s4 = sld [smem:[#allocation0]]
  $region49: #{tpu_custom_call.1} parent=0
    _
  %s6 = ssub.s32 1, %s4
  %s7 = scalar_select 0, %s6, %s4
  $region1: #{tpu_custom_call.1} parent=0
    #allocation2 [shape = 'u8[65536]{0}', space=vmem, size = 0x10000, scoped, tag = 'input window, operand 0']
    #allocation3 [shape = 's32[2]{0}', space=sflag, size = 0x8, scoped, tag = 'scoped memory for tpu_custom_call.1']
    %8 = vsyncpa [#allocation3], 0
    %s9 = scalar_lea.sflag [#allocation3], 1
    %10 = vsyncpa %s9, 0
    loop: start=0, step=1, limit=4
    $region2: #{tpu_custom_call.1} parent=1 // loop_pre_header
      _
    $region3: #{tpu_custom_call.1} parent=1 // loop_header
      %s12 = sphi 0, %s16
      %p13 = scmp.ge.s32.totalorder %s12, 4
      %s19 = sphi 0, %s31
      %s20 = sphi 0, %s27
      %s21 = sphi 0, %s19
      %s22 = sphi 0, %s20
      %s23 = sphi 0, %s21
      %s24 = sphi 0, %s22
      %s36 = sphi 0, %s38
      %s39 = sphi 0, %s36
      %s40 = sphi 0, %s39
      %s56 = sphi 0, %s40
      %s60 = sphi 0, %s60
      %s62 = sphi 0, %s60
      %s63 = sphi 0, %s62
      %s77 = sphi 0, %s63
      %s81 = sphi 0, %s81
      %s83 = sphi 0, %s81
      %s84 = sphi 0, %s83
      %s98 = sphi 0, %s84
      %s106 = sphi 0, %s108
      %s109 = sphi 0, %s106
      %s110 = sphi 0, %s109
      %s126 = sphi 0, %s110
    $region4: #{tpu_custom_call.1} parent=1 // loop_header_branch
      %15 = sbr.rel (%p13) target = $region8
    $region5: #{tpu_custom_call.1} parent=1 // loop_body
      %s17 = ssub.s32 %s12, 1
      %s18 = ssub.s32 %s12, 2
      %s25 = sadd.s32 1, %s20
      %p26 = scmp.ge.s32.totalorder %s25, 1
      %s27 = scalar_select %p26, 0, %s25
      %s28 = sadd.s32 1, %s19
      %s29 = scalar_select %p26, %s28, %s19
      %p30 = scmp.ge.s32.totalorder %s29, 2
      %s31 = scalar_select %p30, 0, %s29
      %s32 = ssub.s32 %s19, %s31
      %s33 = ssub.s32 %s20, %s27
      %s34 = sor.u32 %s32, %s33
      %p35 = scmp.eq.s32.totalorder %s34, 0
      %s37 = sadd.s32 %s36, 1
      %s38 = scalar_select %p35, %s36, %s37
      %p41 = pneg %p35
      %p42 = scmp.eq.s32.totalorder %s12, 1
      %p43 = por %p41, %p42
      %p44 = scmp.ne.s32.totalorder %s36, %s39
      %p45 = scmp.eq.s32.totalorder %s12, 0
      %p46 = por %p44, %p45
      %p47 = scmp.ne.s32.totalorder %s36, %s39
      %p48 = scmp.eq.s32.totalorder %s17, 1
      %p49 = por %p47, %p48
      %p50 = scmp.ne.s32.totalorder %s39, %s40
      %p51 = scmp.eq.s32.totalorder %s17, 0
      %p52 = por %p50, %p51
      %p53 = scmp.ne.s32.totalorder %s39, %s40
      %p54 = scmp.eq.s32.totalorder %s18, 1
      %p55 = por %p53, %p54
      %p57 = scmp.ne.s32.totalorder %s40, %s56
      %p58 = scmp.eq.s32.totalorder %s18, 0
      %p59 = por %p57, %p58
      %s61 = sadd.s32 %s60, 1
      %p64 = scmp.eq.s32.totalorder %s12, 1
      %p65 = scmp.ne.s32.totalorder %s60, %s62
      %p66 = scmp.eq.s32.totalorder %s12, 0
      %p67 = por %p65, %p66
      %p68 = scmp.ne.s32.totalorder %s60, %s62
      %p69 = scmp.eq.s32.totalorder %s17, 1
      %p70 = por %p68, %p69
      %p71 = scmp.ne.s32.totalorder %s62, %s63
      %p72 = scmp.eq.s32.totalorder %s17, 0
      %p73 = por %p71, %p72
      %p74 = scmp.ne.s32.totalorder %s62, %s63
      %p75 = scmp.eq.s32.totalorder %s18, 1
      %p76 = por %p74, %p75
      %p78 = scmp.ne.s32.totalorder %s63, %s77
      %p79 = scmp.eq.s32.totalorder %s18, 0
      %p80 = por %p78, %p79
      %s82 = sadd.s32 %s81, 1
      %p85 = scmp.eq.s32.totalorder %s12, 1
      %p86 = scmp.ne.s32.totalorder %s81, %s83
      %p87 = scmp.eq.s32.totalorder %s12, 0
      %p88 = por %p86, %p87
      %p89 = scmp.ne.s32.totalorder %s81, %s83
      %p90 = scmp.eq.s32.totalorder %s17, 1
      %p91 = por %p89, %p90
      %p92 = scmp.ne.s32.totalorder %s83, %s84
      %p93 = scmp.eq.s32.totalorder %s17, 0
      %p94 = por %p92, %p93
      %p95 = scmp.ne.s32.totalorder %s83, %s84
      %p96 = scmp.eq.s32.totalorder %s18, 1
      %p97 = por %p95, %p96
      %p99 = scmp.ne.s32.totalorder %s84, %s98
      %p100 = scmp.eq.s32.totalorder %s18, 0
      %p101 = por %p99, %p100
      %s102 = ssub.s32 %s19, %s31
      %s103 = ssub.s32 %s20, %s27
      %s104 = sor.u32 %s102, %s103
      %p105 = scmp.eq.s32.totalorder %s104, 0
      %s107 = sadd.s32 %s106, 1
      %s108 = scalar_select %p105, %s106, %s107
      %p111 = pneg %p105
      %p112 = scmp.eq.s32.totalorder %s12, 1
      %p113 = por %p111, %p112
      %p114 = scmp.ne.s32.totalorder %s106, %s109
      %p115 = scmp.eq.s32.totalorder %s12, 0
      %p116 = por %p114, %p115
      %p117 = scmp.ne.s32.totalorder %s106, %s109
      %p118 = scmp.eq.s32.totalorder %s17, 1
      %p119 = por %p117, %p118
      %p120 = scmp.ne.s32.totalorder %s109, %s110
      %p121 = scmp.eq.s32.totalorder %s17, 0
      %p122 = por %p120, %p121
      %p123 = scmp.ne.s32.totalorder %s109, %s110
      %p124 = scmp.eq.s32.totalorder %s18, 1
      %p125 = por %p123, %p124
      %p127 = scmp.ne.s32.totalorder %s110, %s126
      %p128 = scmp.eq.s32.totalorder %s18, 0
      %p129 = por %p127, %p128
      %p130 = scmp.le.s32.totalorder 1, %s12
      %p131 = scmp.lt.s32.totalorder %s12, 3
      %p132 = pnand %p130, %p131
      %p133 = pneg %p132
      // Predicated region
      $region9: #{tpu_custom_call.1} parent=5 // pred_check
        _
      $region10: #{tpu_custom_call.1} parent=5 // pred_check_branch
        %135 = sbr.rel (%p132) target = $region12
      $region11: #{tpu_custom_call.1} parent=5 // pred_region
        %s136 = ssub.s32 %s12, 1
        // Predicated region
        $region13: #{tpu_custom_call.1} parent=11 // pred_check
          %p137 = pneg %p73
        $region14: #{tpu_custom_call.1} parent=11 // pred_check_branch
          %139 = sbr.rel (%p137) target = $region16
        $region15: #{tpu_custom_call.1} parent=11 // pred_region
          _
        $region16: #{tpu_custom_call.1} parent=11 // pred_fallthru
          _
        // Predicated region
        $region17: #{tpu_custom_call.1} parent=11 // pred_check
          %p140 = pneg %p94
        $region18: #{tpu_custom_call.1} parent=11 // pred_check_branch
          %142 = sbr.rel (%p140) target = $region20
        $region19: #{tpu_custom_call.1} parent=11 // pred_region
          _
        $region20: #{tpu_custom_call.1} parent=11 // pred_fallthru
          _
      $region12: #{tpu_custom_call.1} parent=5 // pred_fallthru
        _
      %p143 = scmp.lt.s32.totalorder %s12, 2
      // Predicated region
      $region21: #{tpu_custom_call.1} parent=5 // pred_check
        %p144 = pneg %p143
      $region22: #{tpu_custom_call.1} parent=5 // pred_check_branch
        %146 = sbr.rel (%p144) target = $region24
      $region23: #{tpu_custom_call.1} parent=5 // pred_region
        // Predicated region
        $region25: #{tpu_custom_call.1} parent=23 // pred_check
          %p147 = pneg %p46
        $region26: #{tpu_custom_call.1} parent=23 // pred_check_branch
          %149 = sbr.rel (%p147) target = $region28
        $region27: #{tpu_custom_call.1} parent=23 // pred_region
          %s150 = sand.u32 %s36, 1
          %s151 = scalar_lea.sflag [#allocation3], %s150
          %s152 = sand.u32 %s36, 1
          %s153 = smul.addr %s152, 64
          %s154 = scalar_lea.vmem [#allocation2], %s153
          %s155 = smul.u32 2, %s20
          %157 = vsyncadd %s151, 0
          %s158 = smul.addr %s19, 8
          %s159 = sadd.s32 %s155, %s158
          %s160 = smul.addr %s159, 8
          %s161 = scalar_lea.hbm %s0, %s160
          %s162 = sshll.u32 %s161, 4
          %s163 = int_to_ptr.hbm [resolvable:$true] %s162
          %s164 = sshll.u32 %s154, 4
          %s165 = int_to_ptr.vmem [resolvable:$true] %s164
          %170 = dma.hbm_to_vmem [thread:$0]  %s163, 1024, %s165, %s151, 256, 256, 16
        $region28: #{tpu_custom_call.1} parent=23 // pred_fallthru
          _
      $region24: #{tpu_custom_call.1} parent=5 // pred_fallthru
        _
      %p171 = scmp.le.s32.totalorder 1, %s12
      %p172 = scmp.lt.s32.totalorder %s12, 3
      %p173 = pnand %p171, %p172
      %p174 = pneg %p173
      // Predicated region
      $region29: #{tpu_custom_call.1} parent=5 // pred_check
        _
      $region30: #{tpu_custom_call.1} parent=5 // pred_check_branch
        %176 = sbr.rel (%p173) target = $region32
      $region31: #{tpu_custom_call.1} parent=5 // pred_region
        %s177 = ssub.s32 %s12, 1
        %s178 = sand.u32 %s39, 1
        %s179 = scalar_lea.sflag [#allocation3], %s178
        %s180 = sand.u32 %s39, 1
        %s181 = smul.addr %s180, 64
        %s182 = scalar_lea.vmem [#allocation2], %s181
        // Predicated region
        $region33: #{tpu_custom_call.1} parent=31 // pred_check
          %p183 = pneg %p52
        $region34: #{tpu_custom_call.1} parent=31 // pred_check_branch
          %185 = sbr.rel (%p183) target = $region36
        $region35: #{tpu_custom_call.1} parent=31 // pred_region
          %187 = dma.done %s179, 1024
        $region36: #{tpu_custom_call.1} parent=31 // pred_fallthru
          _
        %s188 = sand.u32 %s39, 1
        %s189 = scalar_lea.sflag [#allocation3], %s188
        %s190 = sand.u32 %s39, 1
        %s191 = smul.addr %s190, 64
        %s192 = scalar_lea.vmem [#allocation2], %s191
        %p193 = pneg %p52
        %p194 = pneg %p49
        %p195 = pneg %p73
        %p196 = pneg %p70
        %p197 = pneg %p94
        %p198 = pneg %p91
        %p199 = pneg %p122
        %p200 = pneg %p119
        %s201 = smul.u32 2, %s22
        %p202 = scmp.lt.s32.totalorder %s21, 1
        %s203 = scalar_select %p202, %s21, 1
        %p204 = scmp.lt.s32.totalorder %s201, 1
        %s205 = scalar_select %p204, %s201, 1
        %s206 = smul.addr %s203, 10
        %s207 = sadd.s32 %s205, %s206
        %s208 = smul.addr %s207, 8
        %s209 = scalar_lea.vmem %s3, %s208
        %s210 = smul.u32 2, %s22
        %s211 = smul.u32 2, %s22
        %p212 = scmp.lt.s32.totalorder %s21, 1
        %s213 = scalar_select %p212, %s21, 1
        %p214 = scmp.lt.s32.totalorder %s211, 1
        %s215 = scalar_select %p214, %s211, 1
        %s216 = smul.addr %s213, 10
        %s217 = sadd.s32 %s215, %s216
        %s218 = smul.addr %s217, 8
        %s219 = scalar_lea.vmem %s3, %s218
        %s220 = smul.u32 2, %s22
        %v221 = vld [vmem:[%s182] sm:$0xff]
        %v222 = vld [vmem:[%s182 + $0x8] sm:$0xff]
        %v223 = vld [vmem:[%s182 + $0x10] sm:$0xff]
        %v224 = vld [vmem:[%s182 + $0x18] sm:$0xff]
        %v225 = vld [vmem:[%s182 + $0x20] sm:$0xff]
        %v226 = vld [vmem:[%s182 + $0x28] sm:$0xff]
        %v227 = vld [vmem:[%s182 + $0x30] sm:$0xff]
        %v228 = vld [vmem:[%s182 + $0x38] sm:$0xff]
        %v229 = vld [vmem:[%s1] sm:$0xff]
        %v230 = vld [vmem:[%s1 + $0x8] sm:$0xff]
        %v231 = vld [vmem:[%s1 + $0x10] sm:$0xff]
        %v232 = vld [vmem:[%s1 + $0x18] sm:$0xff]
        %v233 = vld [vmem:[%s1 + $0x20] sm:$0xf]
        %v234 = vld [vmem:[%s2] sm:$0xff]
        %v235 = vld [vmem:[%s2 + $0x8] sm:$0xff]
        %v236 = vld [vmem:[%s2 + $0x10] sm:$0xff]
        %v237 = vld [vmem:[%s2 + $0x18] sm:$0xff]
        %v238 = vld [vmem:[%s2 + $0x20] sm:$0xf]
        %240 = vset.pattern.permute.xlu0 0
        %241 = vperm.xlu0 %240, %v234
        %v242 = vpop.permute.xlu0 %241
        %245 = vset.pattern.permute.xlu0 0
        %246 = vperm.xlu0 %245, %v235
        %v247 = vpop.permute.xlu0 %246
        %250 = vset.pattern.permute.xlu0 0
        %251 = vperm.xlu0 %250, %v236
        %v252 = vpop.permute.xlu0 %251
        %255 = vset.pattern.permute.xlu0 0
        %256 = vperm.xlu0 %255, %v237
        %v257 = vpop.permute.xlu0 %256
        %260 = vset.pattern.permute.xlu0 0
        %261 = vperm.xlu0 %260, %v238
        %v262 = vpop.permute.xlu0 %261
        %vm264 = vcmask 261120
        %v266 = vsel %vm264, %v229, 0
        %v269 = vsel %vm264, %v230, 0
        %v272 = vsel %vm264, %v231, 0
        %v275 = vsel %vm264, %v232, 0
        %v278 = vsel %vm264, %v233, 0
        %280 = vmatpush.msra.mxu0 0.0
        %281 = vmatpush.msra.mxu0 0.0
        %282 = vmatpush.msra.mxu0 0.0
        %283 = vmatpush.msra.mxu0 0.0
        %284 = vmatpush.msra.mxu0 0.0
        %285 = vmatpush.msra.mxu0 0.0
        %286 = vmatpush.msra.mxu0 0.0
        %287 = vmatpush.msra.mxu0 0.0
        %288 = vmatpush.msra.mxu0 0.0
        %289 = vmatpush.msra.mxu0 0.0
        %290 = vmatpush.msra.mxu0 0.0
        %291 = vmatpush.msra.mxu0 0.0
        %292 = vmatpush.msra.mxu0 %v227
        %293 = vmatpush.msra.mxu0 %v225
        %294 = vmatpush.msra.mxu0 %v223
        %295 = vmatpush.msra.mxu0 %v221
        %296 = vmatmul.f32.gmra.mxu0 %v266
        %v297 = vpop.f32.mrf.mxu0
        %v298 = vadd.f32 %v242, %v297
        %299 = vmatmul.f32.gmra.mxu0 %v269
        %v300 = vpop.f32.mrf.mxu0
        %v301 = vadd.f32 %v247, %v300
        %302 = vmatmul.f32.gmra.mxu0 %v272
        %v303 = vpop.f32.mrf.mxu0
        %v304 = vadd.f32 %v252, %v303
        %305 = vmatmul.f32.gmra.mxu0 %v275
        %v306 = vpop.f32.mrf.mxu0
        %v307 = vadd.f32 %v257, %v306
        %308 = vmatmul.f32.gmra.mxu0 %v278
        %v309 = vpop.f32.mrf.mxu0
        %v310 = vadd.f32 %v262, %v309
        %311 = vdwg.mxu0
        %312 = vmatpush.msra.mxu0 0.0
        %313 = vmatpush.msra.mxu0 0.0
        %314 = vmatpush.msra.mxu0 0.0
        %315 = vmatpush.msra.mxu0 0.0
        %316 = vmatpush.msra.mxu0 0.0
        %317 = vmatpush.msra.mxu0 0.0
        %318 = vmatpush.msra.mxu0 0.0
        %319 = vmatpush.msra.mxu0 0.0
        %320 = vmatpush.msra.mxu0 0.0
        %321 = vmatpush.msra.mxu0 0.0
        %322 = vmatpush.msra.mxu0 0.0
        %323 = vmatpush.msra.mxu0 0.0
        %324 = vmatpush.msra.mxu0 %v228
        %325 = vmatpush.msra.mxu0 %v226
        %326 = vmatpush.msra.mxu0 %v224
        %327 = vmatpush.msra.mxu0 %v222
        %328 = vmatmul.f32.gmra.mxu0 %v266
        %v329 = vpop.f32.mrf.mxu0
        %v330 = vadd.f32 %v242, %v329
        %331 = vmatmul.f32.gmra.mxu0 %v269
        %v332 = vpop.f32.mrf.mxu0
        %v333 = vadd.f32 %v247, %v332
        %334 = vmatmul.f32.gmra.mxu0 %v272
        %v335 = vpop.f32.mrf.mxu0
        %v336 = vadd.f32 %v252, %v335
        %337 = vmatmul.f32.gmra.mxu0 %v275
        %v338 = vpop.f32.mrf.mxu0
        %v339 = vadd.f32 %v257, %v338
        %340 = vmatmul.f32.gmra.mxu0 %v278
        %v341 = vpop.f32.mrf.mxu0
        %v342 = vadd.f32 %v262, %v341
        %343 = vdwg.mxu0
        %344 = vst [vmem:[%s219] sm:$0xff] %v298
        %345 = vst [vmem:[%s219 + $0x8] sm:$0xff] %v330
        %346 = vst [vmem:[%s219 + $0x10] sm:$0xff] %v301
        %347 = vst [vmem:[%s219 + $0x18] sm:$0xff] %v333
        %348 = vst [vmem:[%s219 + $0x20] sm:$0xff] %v304
        %349 = vst [vmem:[%s219 + $0x28] sm:$0xff] %v336
        %350 = vst [vmem:[%s219 + $0x30] sm:$0xff] %v307
        %351 = vst [vmem:[%s219 + $0x38] sm:$0xff] %v339
        %352 = vst [vmem:[%s219 + $0x40] sm:$0xf] %v310
        %353 = vst [vmem:[%s219 + $0x48] sm:$0xf] %v342
        %s354 = smul.u32 2, %s22
        %p355 = scmp.lt.s32.totalorder %s21, 1
        %s356 = scalar_select %p355, %s21, 1
        %p357 = scmp.lt.s32.totalorder %s354, 1
        %s358 = scalar_select %p357, %s354, 1
        %s359 = smul.addr %s356, 10
        %s360 = sadd.s32 %s358, %s359
        %s361 = smul.addr %s360, 8
        %s362 = scalar_lea.vmem %s3, %s361
        // Predicated region
        $region37: #{tpu_custom_call.1} parent=31 // pred_check
          %p363 = pneg %p119
        $region38: #{tpu_custom_call.1} parent=31 // pred_check_branch
          %365 = sbr.rel (%p363) target = $region40
        $region39: #{tpu_custom_call.1} parent=31 // pred_region
          %s366 = smul.u32 2, %s22
        $region40: #{tpu_custom_call.1} parent=31 // pred_fallthru
          _
      $region32: #{tpu_custom_call.1} parent=5 // pred_fallthru
        _
      %p367 = scmp.le.s32.totalorder 2, %s12
      // Predicated region
      $region41: #{tpu_custom_call.1} parent=5 // pred_check
        %p368 = pneg %p367
      $region42: #{tpu_custom_call.1} parent=5 // pred_check_branch
        %370 = sbr.rel (%p368) target = $region44
      $region43: #{tpu_custom_call.1} parent=5 // pred_region
        %s371 = ssub.s32 %s12, 2
        // Predicated region
        $region45: #{tpu_custom_call.1} parent=43 // pred_check
          %p372 = pneg %p125
        $region46: #{tpu_custom_call.1} parent=43 // pred_check_branch
          %374 = sbr.rel (%p372) target = $region48
        $region47: #{tpu_custom_call.1} parent=43 // pred_region
          %s375 = smul.u32 2, %s24
          %p376 = scmp.lt.s32.totalorder %s23, 1
          %s377 = scalar_select %p376, %s23, 1
          %p378 = scmp.lt.s32.totalorder %s375, 1
          %s379 = scalar_select %p378, %s375, 1
          %s380 = smul.addr %s377, 10
          %s381 = sadd.s32 %s379, %s380
          %s382 = smul.addr %s381, 8
          %s383 = scalar_lea.vmem %s3, %s382
        $region48: #{tpu_custom_call.1} parent=43 // pred_fallthru
          _
      $region44: #{tpu_custom_call.1} parent=5 // pred_fallthru
        _
    $region6: #{tpu_custom_call.1} parent=1 // loop_footer
      %s16 = sadd.s32 1, %s12
    $region7: #{tpu_custom_call.1} parent=1 // loop_footer_branch
      %11 = sbr.rel target = $region3
    $region8: #{tpu_custom_call.1} parent=1 // loop_exit
      _
    %384 = vsyncpa [#allocation3], 1
    %s385 = scalar_lea.sflag [#allocation3], 1
    %386 = vsyncpa %s385, 1

</llo_original>
